<compile_context>
chip_gen: v7x
topology: tpu7x:2x2x1
jax: 0.10.0
libtpu: 0.0.40
codegen_flags: <defaults>
</compile_context>

<pallas_src>
import jax
import jax.numpy as jnp
from jax.experimental import pallas as pl
from jax.experimental.pallas import tpu as pltpu


# ---------------------------------------------------------------------------
# Fast path: K-merged, BlockSpec-pipelined copy (works for any F).
# ---------------------------------------------------------------------------
def _make_cat_kernel(K, F):
    def kernel(m_ref, o_ref):
        # m_ref: (K, TN, F) input slab; o_ref: (TN, K*F) contiguous output slab.
        # The in-VMEM vreg copies run far above HBM bandwidth; all perf lives
        # in the DMA shapes chosen by the BlockSpecs, not in this body.
        for k in range(K):                       # static unroll, K is small
            o_ref[:, k * F:(k + 1) * F] = m_ref[k]
    return kernel


def _pick_tile_rows(K, N, F, dtype):
    """Rows per grid step, sized in bytes against the merged-block pipeline
    footprint (2 input + 2 output buffers, each K*TN*F elements)."""
    itemsize = jnp.dtype(dtype).itemsize
    sub = max(8, 32 // itemsize)          # sublane packing: 8 f32 / 16 bf16 / 32 int8
    if N <= sub:
        return N                          # full extent is always a legal block dim
    per_buf_budget = 2 << 20              # ~2 MiB/buffer saturates the copy roofline
    tn = max(sub, per_buf_budget // (K * F * itemsize))
    tn = int(min(tn, N))
    tn -= tn % sub
    tn = max(tn, sub)
    # v7x megacore: the (single) parallel grid axis is sharded across 2 TCs;
    # prefer an even tile count so both cores get balanced DMA streams.
    tiles = -(-N // tn)
    if tiles > 1 and tiles % 2 == 1:
        tiles += 1
        tn2 = -(-N // tiles)
        tn2 = max(sub, tn2 + (-tn2) % sub)        # round UP to sublane multiple
        if tn2 <= tn:
            tn = tn2
    return tn


def _message_cat_agg_blocked(M, tn):
    K, N, F = M.shape
    itemsize = jnp.dtype(M.dtype).itemsize
    grid = (pl.cdiv(N, tn),)
    bytes_accessed = 2 * M.size * itemsize

    # Explicit scoped-VMEM budget: pipeline footprint (2 in + 2 out buffers)
    # plus headroom, deterministic across generations (v5e default is 16 MiB).
    footprint = 4 * K * tn * F * itemsize
    vmem_limit = int(min(64 << 20, max(footprint + (4 << 20), 16 << 20)))

    return pl.pallas_call(
        _make_cat_kernel(K, F),
        out_shape=jax.ShapeDtypeStruct((N, K * F), M.dtype),
        grid=grid,
        in_specs=[
            # Whole K and F extents per step; only rows are tiled.
            pl.BlockSpec((K, tn, F), lambda n: (0, n, 0)),
        ],
        # One contiguous, lane-dense (tn, K*F) writeback per step.
        out_specs=pl.BlockSpec((tn, K * F), lambda n: (n, 0)),
        compiler_params=pltpu.CompilerParams(
            dimension_semantics=("parallel",),
            vmem_limit_bytes=vmem_limit,
        ),
        cost_estimate=pl.CostEstimate(
            flops=0, transcendentals=0, bytes_accessed=bytes_accessed),
    )(M)


# ---------------------------------------------------------------------------
# Fallback: direct HBM->HBM DMA concat.  Only used when even a minimal merged
# row tile (sublane-packing rows) would blow the VMEM budget (huge K*F).
# ---------------------------------------------------------------------------
def _make_dma_concat_kernel(K, F):
    def kernel(m_hbm, o_hbm, sems):
        copies = [
            pltpu.make_async_copy(
                m_hbm.at[k],                    # (N, F) source slab in HBM
                o_hbm.at[:, pl.ds(k * F, F)],   # strided (N, F) destination window
                sems.at[k],
            )
            for k in range(K)
        ]
        for c in copies:                        # all K rectangular DMAs in flight
            c.start()
        for c in copies:
            c.wait()
    return kernel


def _message_cat_agg_dma(M):
    K, N, F = M.shape
    return pl.pallas_call(
        _make_dma_concat_kernel(K, F),
        out_shape=jax.ShapeDtypeStruct((N, K * F), M.dtype),
        in_specs=[pl.BlockSpec(memory_space=pl.ANY)],
        out_specs=pl.BlockSpec(memory_space=pl.ANY),
        scratch_shapes=[pltpu.SemaphoreType.DMA((K,))],
        cost_estimate=pl.CostEstimate(
            flops=0, transcendentals=0,
            bytes_accessed=2 * M.size * jnp.dtype(M.dtype).itemsize),
    )(M)


# ---------------------------------------------------------------------------
# Public entry point.
# ---------------------------------------------------------------------------
def message_cat_agg(M, tile_rows=None):
    """Concatenate M[0], ..., M[K-1] along dim=1.  M: [K, N, F] -> [N, K*F]."""
    K, N, F = M.shape
    itemsize = jnp.dtype(M.dtype).itemsize
    sub = max(8, 32 // itemsize)

    if tile_rows is not None:
        tn = int(min(tile_rows, N))
        if tn < N:
            tn = max(sub, tn - tn % sub)   # keep the sublane-packing constraint
    else:
        tn = _pick_tile_rows(K, N, F, M.dtype)

    # If even this row tile's pipeline footprint is too big (pathological K*F),
    # skip VMEM entirely and do rectangular HBM->HBM DMAs.
    footprint = 4 * K * tn * F * itemsize
    if footprint > (24 << 20):
        return _message_cat_agg_dma(M)
    return _message_cat_agg_blocked(M, tn)


if __name__ == "__main__":
    k0, k1, k2, k3 = jax.random.split(jax.random.PRNGKey(0), 4)

    # 1) f32, lane-aligned F, explicit 128-row tiles -> multi-step parallel grid.
    K, N, F = 4, 512, 128
    M = jax.random.normal(k0, (K, N, F), dtype=jnp.float32)
    out = jax.block_until_ready(message_cat_agg(M, tile_rows=128))
    ref = jnp.concatenate([M[k] for k in range(K)], axis=1)
    assert out.shape == (N, K * F), out.shape
    assert jnp.array_equal(out, ref), "f32 mismatch vs reference"

    # 2) bf16, auto-derived tile size (16-row sublane packing).
    K2, N2, F2 = 3, 256, 128
    M2 = jax.random.normal(k1, (K2, N2, F2), jnp.float32).astype(jnp.bfloat16)
    out2 = jax.block_until_ready(message_cat_agg(M2))
    ref2 = jnp.concatenate([M2[k] for k in range(K2)], axis=1)
    assert out2.shape == (N2, K2 * F2), out2.shape
    assert jnp.array_equal(out2, ref2), "bf16 mismatch vs reference"

    # 3) Ragged N (N % tn != 0): exercises the masked edge-tile writeback.
    K3, N3, F3 = 4, 200, 128
    M3 = jax.random.normal(k2, (K3, N3, F3), dtype=jnp.float32)
    out3 = jax.block_until_ready(message_cat_agg(M3, tile_rows=64))
    ref3 = jnp.concatenate([M3[k] for k in range(K3)], axis=1)
    assert out3.shape == (N3, K3 * F3), out3.shape
    assert jnp.array_equal(out3, ref3), "ragged-N mismatch vs reference"

    # 4) F not a multiple of 128 lanes: the merged block still satisfies the
    #    BlockSpec rule (last dims equal full extents), no DMA fallback needed.
    K4, N4, F4 = 3, 64, 40
    M4 = jax.random.normal(k3, (K4, N4, F4), dtype=jnp.float32)
    out4 = jax.block_until_ready(message_cat_agg(M4))
    ref4 = jnp.concatenate([M4[k] for k in range(K4)], axis=1)
    assert out4.shape == (N4, K4 * F4), out4.shape
    assert jnp.array_equal(out4, ref4), "unaligned-F mismatch vs reference"

    print("KERNEL_OK")
</pallas_src>

<mosaic_0001>
module attributes {stable_mosaic.version = 11 : i64} {
  func.func @kernel(%arg0: i32, %arg1: memref<4x128x128xf32, #tpu.memory_space<vmem>>, %arg2: memref<128x512xf32, #tpu.memory_space<vmem>>) attributes {dimension_semantics = [#tpu.dimension_semantics<parallel>], iteration_bounds = array<i64: 4>, scalar_prefetch = 0 : i64, scratch_operands = 0 : i64, tpu.core_type = #tpu.core_type<tc>, window_params = [{transform_indices = @transform_0, window_bounds = array<i64: 4, 128, 128>}, {transform_indices = @transform_1, window_bounds = array<i64: 128, 512>}]} {
    %c0 = arith.constant 0 : index
    %c0_0 = arith.constant 0 : index
    %c0_1 = arith.constant 0 : index
    %0 = vector.load %arg1[%c0, %c0_0, %c0_1] : memref<4x128x128xf32, #tpu.memory_space<vmem>>, vector<1x128x128xf32>
    %1 = vector.shape_cast %0 : vector<1x128x128xf32> to vector<128x128xf32>
    %c0_2 = arith.constant 0 : index
    %c0_3 = arith.constant 0 : index
    %2 = vector.load %arg2[%c0_2, %c0_3] : memref<128x512xf32, #tpu.memory_space<vmem>>, vector<128x128xf32>
    tpu.vector_store %arg2[%c0_2, %c0_3], %1 {strides = array<i32>} : memref<128x512xf32, #tpu.memory_space<vmem>>, vector<128x128xf32>,
    %c1 = arith.constant 1 : index
    %c0_4 = arith.constant 0 : index
    %c0_5 = arith.constant 0 : index
    %3 = vector.load %arg1[%c1, %c0_4, %c0_5] : memref<4x128x128xf32, #tpu.memory_space<vmem>>, vector<1x128x128xf32>
    %4 = vector.shape_cast %3 : vector<1x128x128xf32> to vector<128x128xf32>
    %c0_6 = arith.constant 0 : index
    %c128 = arith.constant 128 : index
    %5 = vector.load %arg2[%c0_6, %c128] : memref<128x512xf32, #tpu.memory_space<vmem>>, vector<128x128xf32>
    tpu.vector_store %arg2[%c0_6, %c128], %4 {strides = array<i32>} : memref<128x512xf32, #tpu.memory_space<vmem>>, vector<128x128xf32>,
    %c2 = arith.constant 2 : index
    %c0_7 = arith.constant 0 : index
    %c0_8 = arith.constant 0 : index
    %6 = vector.load %arg1[%c2, %c0_7, %c0_8] : memref<4x128x128xf32, #tpu.memory_space<vmem>>, vector<1x128x128xf32>
    %7 = vector.shape_cast %6 : vector<1x128x128xf32> to vector<128x128xf32>
    %c0_9 = arith.constant 0 : index
    %c256 = arith.constant 256 : index
    %8 = vector.load %arg2[%c0_9, %c256] : memref<128x512xf32, #tpu.memory_space<vmem>>, vector<128x128xf32>
    tpu.vector_store %arg2[%c0_9, %c256], %7 {strides = array<i32>} : memref<128x512xf32, #tpu.memory_space<vmem>>, vector<128x128xf32>,
    %c3 = arith.constant 3 : index
    %c0_10 = arith.constant 0 : index
    %c0_11 = arith.constant 0 : index
    %9 = vector.load %arg1[%c3, %c0_10, %c0_11] : memref<4x128x128xf32, #tpu.memory_space<vmem>>, vector<1x128x128xf32>
    %10 = vector.shape_cast %9 : vector<1x128x128xf32> to vector<128x128xf32>
    %c0_12 = arith.constant 0 : index
    %c384 = arith.constant 384 : index
    %11 = vector.load %arg2[%c0_12, %c384] : memref<128x512xf32, #tpu.memory_space<vmem>>, vector<128x128xf32>
    tpu.vector_store %arg2[%c0_12, %c384], %10 {strides = array<i32>} : memref<128x512xf32, #tpu.memory_space<vmem>>, vector<128x128xf32>,
    return
  }
  func.func @transform_0(%arg0: i32) -> (i32, i32, i32) {
    %c0_i32 = arith.constant 0 : i32
    %c0_i32_0 = arith.constant 0 : i32
    %c0_i32_1 = arith.constant 0 : i32
    return %c0_i32, %arg0, %c0_i32_0 : i32, i32, i32
  }
  func.func @transform_1(%arg0: i32) -> (i32, i32) {
    %c0_i32 = arith.constant 0 : i32
    %c0_i32_0 = arith.constant 0 : i32
    return %arg0, %c0_i32 : i32, i32
  }
}

</mosaic_0001>

<llo_original>
// kernel: tpu_custom_call.1
$region0: #{tpu_custom_call.1}
  #allocation0 [shape = 'u32[]', space=smem, size = 0x4, offset = 0x4, fixed_abs, tag = 'smem constant byte address 0x4 - core index']
  #allocation1 [shape = 'u32[144,128]{1,0:T(1,128)}', space=vmem, size = 0x12000, scoped, tag = 'internal scratch']
  #allocation6 [shape = 's32[]', space=sflag, size = 0x4, offset = 0, fixed_abs, tag = 'sflag constant byte address 0x0 - dummy sync flag']
  %s0 = inlined_call_operand.hbm [shape: f32[4,512,128], index: 0, kind: input, shape index: {}]
  %s1 = inlined_call_operand.hbm [shape: f32[512,512], index: 1, kind: output, shape index: {}]
  %s2 = sld [smem:[#allocation0]]
  $region41: #{tpu_custom_call.1} parent=0
    _
  %s4 = ssub.s32 1, %s2
  %s5 = scalar_select 0, %s4, %s2
  $region1: #{tpu_custom_call.1} parent=0
    #allocation2 [shape = 'u8[524288]{0}', space=vmem, size = 0x80000, scoped, tag = 'input window, operand 0']
    #allocation3 [shape = 's32[2]{0}', space=sflag, size = 0x8, scoped, tag = 'scoped memory for tpu_custom_call.1']
    #allocation4 [shape = 's32[2]{0}', space=sflag, size = 0x8, scoped, tag = 'scoped memory for tpu_custom_call.1']
    #allocation5 [shape = 'u8[524288]{0}', space=vmem, size = 0x80000, scoped, tag = 'output window, operand 0']
    %6 = vsyncpa [#allocation3], 0
    %s7 = scalar_lea.sflag [#allocation3], 1
    %8 = vsyncpa %s7, 0
    %9 = vsyncpa [#allocation4], 0
    %s10 = scalar_lea.sflag [#allocation4], 1
    %11 = vsyncpa %s10, 0
    loop: start=0, step=1, limit=6
    $region2: #{tpu_custom_call.1} parent=1 // loop_pre_header
      _
    $region3: #{tpu_custom_call.1} parent=1 // loop_header
      %s13 = sphi 0, %s17
      %p14 = scmp.ge.s32.totalorder %s13, 6
      %s23 = sphi 0, %s25
      %s26 = sphi 0, %s23
      %s27 = sphi 0, %s26
      %s43 = sphi 0, %s27
      %s49 = sphi 0, %s51
      %s52 = sphi 0, %s49
      %s53 = sphi 0, %s52
      %s69 = sphi 0, %s53
    $region4: #{tpu_custom_call.1} parent=1 // loop_header_branch
      %16 = sbr.rel (%p14) target = $region8
    $region5: #{tpu_custom_call.1} parent=1 // loop_body
      %s18 = ssub.s32 %s13, 1
      %s19 = ssub.s32 %s13, 2
      %s20 = sadd.s32 %s13, 1
      %s21 = ssub.s32 %s13, %s20
      %p22 = scmp.eq.s32.totalorder %s21, 0
      %s24 = sadd.s32 %s23, 1
      %s25 = scalar_select %p22, %s23, %s24
      %p28 = pneg %p22
      %p29 = scmp.eq.s32.totalorder %s13, 3
      %p30 = por %p28, %p29
      %p31 = scmp.ne.s32.totalorder %s23, %s26
      %p32 = scmp.eq.s32.totalorder %s13, 0
      %p33 = por %p31, %p32
      %p34 = scmp.ne.s32.totalorder %s23, %s26
      %p35 = scmp.eq.s32.totalorder %s18, 3
      %p36 = por %p34, %p35
      %p37 = scmp.ne.s32.totalorder %s26, %s27
      %p38 = scmp.eq.s32.totalorder %s18, 0
      %p39 = por %p37, %p38
      %p40 = scmp.ne.s32.totalorder %s26, %s27
      %p41 = scmp.eq.s32.totalorder %s19, 3
      %p42 = por %p40, %p41
      %p44 = scmp.ne.s32.totalorder %s27, %s43
      %p45 = scmp.eq.s32.totalorder %s19, 0
      %p46 = por %p44, %p45
      %s47 = ssub.s32 %s13, %s20
      %p48 = scmp.eq.s32.totalorder %s47, 0
      %s50 = sadd.s32 %s49, 1
      %s51 = scalar_select %p48, %s49, %s50
      %p54 = pneg %p48
      %p55 = scmp.eq.s32.totalorder %s13, 3
      %p56 = por %p54, %p55
      %p57 = scmp.ne.s32.totalorder %s49, %s52
      %p58 = scmp.eq.s32.totalorder %s13, 0
      %p59 = por %p57, %p58
      %p60 = scmp.ne.s32.totalorder %s49, %s52
      %p61 = scmp.eq.s32.totalorder %s18, 3
      %p62 = por %p60, %p61
      %p63 = scmp.ne.s32.totalorder %s52, %s53
      %p64 = scmp.eq.s32.totalorder %s18, 0
      %p65 = por %p63, %p64
      %p66 = scmp.ne.s32.totalorder %s52, %s53
      %p67 = scmp.eq.s32.totalorder %s19, 3
      %p68 = por %p66, %p67
      %p70 = scmp.ne.s32.totalorder %s53, %s69
      %p71 = scmp.eq.s32.totalorder %s19, 0
      %p72 = por %p70, %p71
      %p73 = scmp.le.s32.totalorder 1, %s13
      %p74 = scmp.lt.s32.totalorder %s13, 5
      %p75 = pnand %p73, %p74
      %p76 = pneg %p75
      // Predicated region
      $region9: #{tpu_custom_call.1} parent=5 // pred_check
        _
      $region10: #{tpu_custom_call.1} parent=5 // pred_check_branch
        %78 = sbr.rel (%p75) target = $region12
      $region11: #{tpu_custom_call.1} parent=5 // pred_region
        %s79 = ssub.s32 %s13, 1
      $region12: #{tpu_custom_call.1} parent=5 // pred_fallthru
        _
      %p80 = scmp.lt.s32.totalorder %s13, 4
      // Predicated region
      $region13: #{tpu_custom_call.1} parent=5 // pred_check
        %p81 = pneg %p80
      $region14: #{tpu_custom_call.1} parent=5 // pred_check_branch
        %83 = sbr.rel (%p81) target = $region16
      $region15: #{tpu_custom_call.1} parent=5 // pred_region
        // Predicated region
        $region17: #{tpu_custom_call.1} parent=15 // pred_check
          %p84 = pneg %p33
        $region18: #{tpu_custom_call.1} parent=15 // pred_check_branch
          %86 = sbr.rel (%p84) target = $region20
        $region19: #{tpu_custom_call.1} parent=15 // pred_region
          #allocation7 [shape = 'u32[6]{0}', space=smem, size = 0x18, scoped, tag = 'DMA stride descriptor']
          %s87 = sand.u32 %s23, 1
          %s88 = scalar_lea.sflag [#allocation3], %s87
          %s89 = sand.u32 %s23, 1
          %s90 = smul.addr %s89, 512
          %s91 = scalar_lea.vmem [#allocation2], %s90
          %s92 = smul.u32 16, %s13
          %s94 = ssub.s32 8192, 8192
          %95 = vsyncadd %s88, %s94
          %s96 = smul.addr %s92, 128
          %s97 = scalar_lea.hbm %s0, %s96
          %s99 = sshll.u32 1, 14
          %s100 = sxor.u32 4294967295, %s99
          %s102 = sld [smem:[#allocation0]]
          %s103 = sadd.s32 2, %s102
          %s105 = sshll.u32 7, 26
          %s106 = sxor.u32 4294967295, %s105
          %s107 = sand.u32 0, %s106
          %s108 = sshll.u32 %s103, 26
          %s109 = sor.u32 %s107, %s108
          %s110 = sshll.u32 %s91, 4
          %s111 = int_to_ptr.vmem [resolvable:$true] %s110
          %117 = sst [smem:[#allocation7]] 8192
          %s118 = scalar_lea.smem [#allocation7], 1
          %119 = sst [smem:[%s118]] 2048
          %s120 = scalar_lea.smem [#allocation7], 2
          %121 = sst [smem:[%s120]] 16
          %s122 = scalar_lea.smem [#allocation7], 3
          %123 = sst [smem:[%s122]] 128
          %s124 = scalar_lea.smem [#allocation7], 4
          %125 = sst [smem:[%s124]] 128
          %s126 = scalar_lea.smem [#allocation7], 5
          %127 = sst [smem:[%s126]] 8
          %129 = dma.general %s97, 8192, %s111, %s88, [#allocation6], [#allocation7], %s109, 0
        $region20: #{tpu_custom_call.1} parent=15 // pred_fallthru
          _
      $region16: #{tpu_custom_call.1} parent=5 // pred_fallthru
        _
      %p130 = scmp.le.s32.totalorder 1, %s13
      %p131 = scmp.lt.s32.totalorder %s13, 5
      %p132 = pnand %p130, %p131
      %p133 = pneg %p132
      // Predicated region
      $region21: #{tpu_custom_call.1} parent=5 // pred_check
        _
      $region22: #{tpu_custom_call.1} parent=5 // pred_check_branch
        %135 = sbr.rel (%p132) target = $region24
      $region23: #{tpu_custom_call.1} parent=5 // pred_region
        %s136 = ssub.s32 %s13, 1
        %s137 = sand.u32 %s26, 1
        %s138 = scalar_lea.sflag [#allocation3], %s137
        %s139 = sand.u32 %s26, 1
        %s140 = smul.addr %s139, 512
        %s141 = scalar_lea.vmem [#allocation2], %s140
        // Predicated region
        $region25: #{tpu_custom_call.1} parent=23 // pred_check
          %p142 = pneg %p39
        $region26: #{tpu_custom_call.1} parent=23 // pred_check_branch
          %144 = sbr.rel (%p142) target = $region28
        $region27: #{tpu_custom_call.1} parent=23 // pred_region
          %145 = dma.done %s138, 8192
        $region28: #{tpu_custom_call.1} parent=23 // pred_fallthru
          _
        %s146 = sand.u32 %s26, 1
        %s147 = scalar_lea.sflag [#allocation3], %s146
        %s148 = sand.u32 %s26, 1
        %s149 = smul.addr %s148, 512
        %s150 = scalar_lea.vmem [#allocation2], %s149
        %p151 = pneg %p39
        %p152 = pneg %p36
        %p153 = pneg %p65
        %p154 = pneg %p62
        %s155 = sand.u32 %s52, 1
        %s156 = scalar_lea.sflag [#allocation4], %s155
        %s157 = sand.u32 %s52, 1
        %s158 = smul.addr %s157, 512
        %s159 = scalar_lea.vmem [#allocation5], %s158
        %s160 = smul.u32 16, %s18
        %s161 = smul.u32 16, %s18
        %v162 = vld [vmem:[%s141] sm:$0xff]
        %v163 = vld [vmem:[%s141 + $0x8] sm:$0xff]
        %v164 = vld [vmem:[%s141 + $0x10] sm:$0xff]
        %v165 = vld [vmem:[%s141 + $0x18] sm:$0xff]
        %v166 = vld [vmem:[%s141 + $0x20] sm:$0xff]
        %v167 = vld [vmem:[%s141 + $0x28] sm:$0xff]
        %v168 = vld [vmem:[%s141 + $0x30] sm:$0xff]
        %v169 = vld [vmem:[%s141 + $0x38] sm:$0xff]
        %v170 = vld [vmem:[%s141 + $0x40] sm:$0xff]
        %v171 = vld [vmem:[%s141 + $0x48] sm:$0xff]
        %v172 = vld [vmem:[%s141 + $0x50] sm:$0xff]
        %v173 = vld [vmem:[%s141 + $0x58] sm:$0xff]
        %v174 = vld [vmem:[%s141 + $0x60] sm:$0xff]
        %v175 = vld [vmem:[%s141 + $0x68] sm:$0xff]
        %v176 = vld [vmem:[%s141 + $0x70] sm:$0xff]
        %v177 = vld [vmem:[%s141 + $0x78] sm:$0xff]
        %178 = vst [vmem:[%s159] sm:$0xff] %v162
        %179 = vst [vmem:[%s159 + $0x20] sm:$0xff] %v163
        %180 = vst [vmem:[%s159 + $0x40] sm:$0xff] %v164
        %181 = vst [vmem:[%s159 + $0x60] sm:$0xff] %v165
        %182 = vst [vmem:[%s159 + $0x80] sm:$0xff] %v166
        %183 = vst [vmem:[%s159 + $0xa0] sm:$0xff] %v167
        %184 = vst [vmem:[%s159 + $0xc0] sm:$0xff] %v168
        %185 = vst [vmem:[%s159 + $0xe0] sm:$0xff] %v169
        %186 = vst [vmem:[%s159 + $0x100] sm:$0xff] %v170
        %187 = vst [vmem:[%s159 + $0x120] sm:$0xff] %v171
        %188 = vst [vmem:[%s159 + $0x140] sm:$0xff] %v172
        %189 = vst [vmem:[%s159 + $0x160] sm:$0xff] %v173
        %190 = vst [vmem:[%s159 + $0x180] sm:$0xff] %v174
        %191 = vst [vmem:[%s159 + $0x1a0] sm:$0xff] %v175
        %192 = vst [vmem:[%s159 + $0x1c0] sm:$0xff] %v176
        %193 = vst [vmem:[%s159 + $0x1e0] sm:$0xff] %v177
        %s194 = scalar_lea.vmem %s141, 128 [#allocation2]
        %v195 = vld [vmem:[%s194] sm:$0xff]
        %v196 = vld [vmem:[%s194 + $0x8] sm:$0xff]
        %v197 = vld [vmem:[%s194 + $0x10] sm:$0xff]
        %v198 = vld [vmem:[%s194 + $0x18] sm:$0xff]
        %v199 = vld [vmem:[%s194 + $0x20] sm:$0xff]
        %v200 = vld [vmem:[%s194 + $0x28] sm:$0xff]
        %v201 = vld [vmem:[%s194 + $0x30] sm:$0xff]
        %v202 = vld [vmem:[%s194 + $0x38] sm:$0xff]
        %v203 = vld [vmem:[%s194 + $0x40] sm:$0xff]
        %v204 = vld [vmem:[%s194 + $0x48] sm:$0xff]
        %v205 = vld [vmem:[%s194 + $0x50] sm:$0xff]
        %v206 = vld [vmem:[%s194 + $0x58] sm:$0xff]
        %v207 = vld [vmem:[%s194 + $0x60] sm:$0xff]
        %v208 = vld [vmem:[%s194 + $0x68] sm:$0xff]
        %v209 = vld [vmem:[%s194 + $0x70] sm:$0xff]
        %v210 = vld [vmem:[%s194 + $0x78] sm:$0xff]
        %211 = vst [vmem:[%s159 + $0x8] sm:$0xff] %v195
        %212 = vst [vmem:[%s159 + $0x28] sm:$0xff] %v196
        %213 = vst [vmem:[%s159 + $0x48] sm:$0xff] %v197
        %214 = vst [vmem:[%s159 + $0x68] sm:$0xff] %v198
        %215 = vst [vmem:[%s159 + $0x88] sm:$0xff] %v199
        %216 = vst [vmem:[%s159 + $0xa8] sm:$0xff] %v200
        %217 = vst [vmem:[%s159 + $0xc8] sm:$0xff] %v201
        %218 = vst [vmem:[%s159 + $0xe8] sm:$0xff] %v202
        %219 = vst [vmem:[%s159 + $0x108] sm:$0xff] %v203
        %220 = vst [vmem:[%s159 + $0x128] sm:$0xff] %v204
        %221 = vst [vmem:[%s159 + $0x148] sm:$0xff] %v205
        %222 = vst [vmem:[%s159 + $0x168] sm:$0xff] %v206
        %223 = vst [vmem:[%s159 + $0x188] sm:$0xff] %v207
        %224 = vst [vmem:[%s159 + $0x1a8] sm:$0xff] %v208
        %225 = vst [vmem:[%s159 + $0x1c8] sm:$0xff] %v209
        %226 = vst [vmem:[%s159 + $0x1e8] sm:$0xff] %v210
        %s227 = scalar_lea.vmem %s141, 256 [#allocation2]
        %v228 = vld [vmem:[%s227] sm:$0xff]
        %v229 = vld [vmem:[%s227 + $0x8] sm:$0xff]
        %v230 = vld [vmem:[%s227 + $0x10] sm:$0xff]
        %v231 = vld [vmem:[%s227 + $0x18] sm:$0xff]
        %v232 = vld [vmem:[%s227 + $0x20] sm:$0xff]
        %v233 = vld [vmem:[%s227 + $0x28] sm:$0xff]
        %v234 = vld [vmem:[%s227 + $0x30] sm:$0xff]
        %v235 = vld [vmem:[%s227 + $0x38] sm:$0xff]
        %v236 = vld [vmem:[%s227 + $0x40] sm:$0xff]
        %v237 = vld [vmem:[%s227 + $0x48] sm:$0xff]
        %v238 = vld [vmem:[%s227 + $0x50] sm:$0xff]
        %v239 = vld [vmem:[%s227 + $0x58] sm:$0xff]
        %v240 = vld [vmem:[%s227 + $0x60] sm:$0xff]
        %v241 = vld [vmem:[%s227 + $0x68] sm:$0xff]
        %v242 = vld [vmem:[%s227 + $0x70] sm:$0xff]
        %v243 = vld [vmem:[%s227 + $0x78] sm:$0xff]
        %244 = vst [vmem:[%s159 + $0x10] sm:$0xff] %v228
        %245 = vst [vmem:[%s159 + $0x30] sm:$0xff] %v229
        %246 = vst [vmem:[%s159 + $0x50] sm:$0xff] %v230
        %247 = vst [vmem:[%s159 + $0x70] sm:$0xff] %v231
        %248 = vst [vmem:[%s159 + $0x90] sm:$0xff] %v232
        %249 = vst [vmem:[%s159 + $0xb0] sm:$0xff] %v233
        %250 = vst [vmem:[%s159 + $0xd0] sm:$0xff] %v234
        %251 = vst [vmem:[%s159 + $0xf0] sm:$0xff] %v235
        %252 = vst [vmem:[%s159 + $0x110] sm:$0xff] %v236
        %253 = vst [vmem:[%s159 + $0x130] sm:$0xff] %v237
        %254 = vst [vmem:[%s159 + $0x150] sm:$0xff] %v238
        %255 = vst [vmem:[%s159 + $0x170] sm:$0xff] %v239
        %256 = vst [vmem:[%s159 + $0x190] sm:$0xff] %v240
        %257 = vst [vmem:[%s159 + $0x1b0] sm:$0xff] %v241
        %258 = vst [vmem:[%s159 + $0x1d0] sm:$0xff] %v242
        %259 = vst [vmem:[%s159 + $0x1f0] sm:$0xff] %v243
        %s260 = scalar_lea.vmem %s141, 384 [#allocation2]
        %v261 = vld [vmem:[%s260] sm:$0xff]
        %v262 = vld [vmem:[%s260 + $0x8] sm:$0xff]
        %v263 = vld [vmem:[%s260 + $0x10] sm:$0xff]
        %v264 = vld [vmem:[%s260 + $0x18] sm:$0xff]
        %v265 = vld [vmem:[%s260 + $0x20] sm:$0xff]
        %v266 = vld [vmem:[%s260 + $0x28] sm:$0xff]
        %v267 = vld [vmem:[%s260 + $0x30] sm:$0xff]
        %v268 = vld [vmem:[%s260 + $0x38] sm:$0xff]
        %v269 = vld [vmem:[%s260 + $0x40] sm:$0xff]
        %v270 = vld [vmem:[%s260 + $0x48] sm:$0xff]
        %v271 = vld [vmem:[%s260 + $0x50] sm:$0xff]
        %v272 = vld [vmem:[%s260 + $0x58] sm:$0xff]
        %v273 = vld [vmem:[%s260 + $0x60] sm:$0xff]
        %v274 = vld [vmem:[%s260 + $0x68] sm:$0xff]
        %v275 = vld [vmem:[%s260 + $0x70] sm:$0xff]
        %v276 = vld [vmem:[%s260 + $0x78] sm:$0xff]
        %277 = vst [vmem:[%s159 + $0x18] sm:$0xff] %v261
        %278 = vst [vmem:[%s159 + $0x38] sm:$0xff] %v262
        %279 = vst [vmem:[%s159 + $0x58] sm:$0xff] %v263
        %280 = vst [vmem:[%s159 + $0x78] sm:$0xff] %v264
        %281 = vst [vmem:[%s159 + $0x98] sm:$0xff] %v265
        %282 = vst [vmem:[%s159 + $0xb8] sm:$0xff] %v266
        %283 = vst [vmem:[%s159 + $0xd8] sm:$0xff] %v267
        %284 = vst [vmem:[%s159 + $0xf8] sm:$0xff] %v268
        %285 = vst [vmem:[%s159 + $0x118] sm:$0xff] %v269
        %286 = vst [vmem:[%s159 + $0x138] sm:$0xff] %v270
        %287 = vst [vmem:[%s159 + $0x158] sm:$0xff] %v271
        %288 = vst [vmem:[%s159 + $0x178] sm:$0xff] %v272
        %289 = vst [vmem:[%s159 + $0x198] sm:$0xff] %v273
        %290 = vst [vmem:[%s159 + $0x1b8] sm:$0xff] %v274
        %291 = vst [vmem:[%s159 + $0x1d8] sm:$0xff] %v275
        %292 = vst [vmem:[%s159 + $0x1f8] sm:$0xff] %v276
        %s293 = sand.u32 %s52, 1
        %s294 = scalar_lea.sflag [#allocation4], %s293
        %s295 = sand.u32 %s52, 1
        %s296 = smul.addr %s295, 512
        %s297 = scalar_lea.vmem [#allocation5], %s296
        // Predicated region
        $region29: #{tpu_custom_call.1} parent=23 // pred_check
          %p298 = pneg %p62
        $region30: #{tpu_custom_call.1} parent=23 // pred_check_branch
          %300 = sbr.rel (%p298) target = $region32
        $region31: #{tpu_custom_call.1} parent=23 // pred_region
          %s301 = smul.u32 16, %s18
          %s303 = ssub.s32 8192, 8192
          %304 = vsyncadd %s294, %s303
          %s305 = smul.addr %s301, 4
          %s306 = smul.addr %s305, 128
          %s307 = scalar_lea.hbm %s1, %s306
          %s308 = sshll.u32 %s297, 4
          %s309 = int_to_ptr.vmem [resolvable:$true] %s308
          %314 = dma.vmem_to_hbm [thread:$0]  %s309, 8192, %s307, %s294, 512, 512, 32
        $region32: #{tpu_custom_call.1} parent=23 // pred_fallthru
          _
      $region24: #{tpu_custom_call.1} parent=5 // pred_fallthru
        _
      %p315 = scmp.le.s32.totalorder 2, %s13
      // Predicated region
      $region33: #{tpu_custom_call.1} parent=5 // pred_check
        %p316 = pneg %p315
      $region34: #{tpu_custom_call.1} parent=5 // pred_check_branch
        %318 = sbr.rel (%p316) target = $region36
      $region35: #{tpu_custom_call.1} parent=5 // pred_region
        %s319 = ssub.s32 %s13, 2
        // Predicated region
        $region37: #{tpu_custom_call.1} parent=35 // pred_check
          %p320 = pneg %p68
        $region38: #{tpu_custom_call.1} parent=35 // pred_check_branch
          %322 = sbr.rel (%p320) target = $region40
        $region39: #{tpu_custom_call.1} parent=35 // pred_region
          %s323 = sand.u32 %s53, 1
          %s324 = scalar_lea.sflag [#allocation4], %s323
          %s325 = sand.u32 %s53, 1
          %s326 = smul.addr %s325, 512
          %s327 = scalar_lea.vmem [#allocation5], %s326
          %328 = dma.done %s324, 8192
        $region40: #{tpu_custom_call.1} parent=35 // pred_fallthru
          _
      $region36: #{tpu_custom_call.1} parent=5 // pred_fallthru
        _
    $region6: #{tpu_custom_call.1} parent=1 // loop_footer
      %s17 = sadd.s32 1, %s13
    $region7: #{tpu_custom_call.1} parent=1 // loop_footer_branch
      %12 = sbr.rel target = $region3
    $region8: #{tpu_custom_call.1} parent=1 // loop_exit
      _
    %329 = vsyncpa [#allocation3], 1
    %s330 = scalar_lea.sflag [#allocation3], 1
    %331 = vsyncpa %s330, 1
    %332 = vsyncpa [#allocation4], 1
    %s333 = scalar_lea.sflag [#allocation4], 1
    %334 = vsyncpa %s333, 1

</llo_original>
